<compile_context>
chip_gen: v7x
topology: tpu7x:2x2x1
jax: 0.10.0
libtpu: 0.0.40
codegen_flags: <defaults>
</compile_context>

<pallas_src>
import functools

import jax
import jax.numpy as jnp
import numpy as np
from jax.experimental import pallas as pl
from jax.experimental.pallas import tpu as pltpu


TN_MAX = 4096  # boxes per grid step (lane-dense; big tiles amortize the ~0.35us/step grid overhead)


# ---------------- Pallas kernel ----------------

def _fused_kernel(lp_ref, lt_ref, conf_ref, tgt_ref, mining_ref, part_ref, *, n_boxes, tn):
    """Fused per-box losses + on-chip partial reduction for one (B, tn) tile of boxes.

    lp_ref, lt_ref : (B, 4, tn) f32   loc preds / targets (coords on sublanes, boxes on lanes)
    conf_ref       : (B, 2, tn) f32   [background, face] logits
    tgt_ref        : (B, tn)    i32   labels (0 = background, >0 = face)
    mining_ref     : (B, tn)    f32   out: CE with positives AND padded lanes zeroed (sort operand)
    part_ref       : (1, 8, 128) f32  out: per-tile partial of loc_loss + sum_pos(ce) (broadcast)
    """
    i = pl.program_id(0)

    tgt = tgt_ref[...]
    pos = tgt > 0
    posf = pos.astype(jnp.float32)

    conf = conf_ref[...]
    c0 = conf[:, 0, :]
    c1 = conf[:, 1, :]
    # 2-class logsumexp with a single exp (halves EUP work): lse = max + log(1 + exp(-|c0 - c1|))
    lse = jnp.maximum(c0, c1) + jnp.log(1.0 + jnp.exp(-jnp.abs(c0 - c1)))
    ce = lse - jnp.where(pos, c1, c0)          # gather(logits, target) for num_classes == 2

    # hard-negative-mining operand: positives and padded (out-of-range) lanes contribute 0
    col = jax.lax.broadcasted_iota(jnp.int32, tgt.shape, 1) + i * tn
    valid = col < n_boxes
    mining_ref[...] = jnp.where(jnp.logical_and(valid, jnp.logical_not(pos)), ce, 0.0)

    # smooth-L1 over the 4 coords, masked by pos (padded lanes have posf == 0)
    d = lp_ref[...] - lt_ref[...]
    ad = jnp.abs(d)
    s = jnp.where(ad < 1.0, 0.5 * d * d, ad - 0.5)
    sl1 = jnp.sum(s, axis=1)                   # (B, tn)

    # sort-independent numerator terms, reduced on-chip to one scalar per tile
    part = jnp.sum((sl1 + ce) * posf)
    part_ref[...] = jnp.full(part_ref.shape, part, dtype=jnp.float32)


# ---------------- forward pass ----------------

def faceboxloss_forward(loc_preds, loc_targets, conf_preds, conf_targets, *, tn_max=TN_MAX):
    """loc_preds/loc_targets: (B, N, 4) f32; conf_preds: (B, N, 2) f32; conf_targets: (B, N) int."""
    loc_preds = loc_preds.astype(jnp.float32)
    loc_targets = loc_targets.astype(jnp.float32)
    conf_preds = conf_preds.astype(jnp.float32)
    conf_targets = conf_targets.astype(jnp.int32)

    B, N, _ = loc_preds.shape
    tn = min(tn_max, pl.cdiv(N, 128) * 128)       # lane-dense tile, capped by the (padded) row
    n_pad = pl.cdiv(N, tn) * tn
    pad = n_pad - N
    n_tiles = n_pad // tn

    # ---- XLA glue: channels-on-sublanes layout + pad the box axis to a tile multiple ----
    # TODO(synk): the (B,N,4)->(B,4,N) / (B,N,2)->(B,2,N) transposes cost one HBM read+write each;
    # avoiding them needs an interleaved-lane group-sum inside the kernel (fragile Mosaic reshape).
    lp = jnp.pad(jnp.transpose(loc_preds, (0, 2, 1)), ((0, 0), (0, 0), (0, pad)))
    lt = jnp.pad(jnp.transpose(loc_targets, (0, 2, 1)), ((0, 0), (0, 0), (0, pad)))
    cf = jnp.pad(jnp.transpose(conf_preds, (0, 2, 1)), ((0, 0), (0, 0), (0, pad)))
    tgt = jnp.pad(conf_targets, ((0, 0), (0, pad)))   # pads are background (masked in-kernel)

    kernel = functools.partial(_fused_kernel, n_boxes=N, tn=tn)
    mining, partials = pl.pallas_call(
        kernel,
        out_shape=(
            jax.ShapeDtypeStruct((B, n_pad), jnp.float32),
            jax.ShapeDtypeStruct((n_tiles, 8, 128), jnp.float32),
        ),
        grid=(n_tiles,),
        in_specs=[
            pl.BlockSpec((B, 4, tn), lambda i: (0, 0, i)),
            pl.BlockSpec((B, 4, tn), lambda i: (0, 0, i)),
            pl.BlockSpec((B, 2, tn), lambda i: (0, 0, i)),
            pl.BlockSpec((B, tn), lambda i: (0, i)),
        ],
        out_specs=[
            pl.BlockSpec((B, tn), lambda i: (0, i)),
            pl.BlockSpec((1, 8, 128), lambda i: (i, 0, 0)),
        ],
        compiler_params=pltpu.CompilerParams(
            dimension_semantics=("parallel",),        # megacore-friendly (disjoint output blocks)
            vmem_limit_bytes=32 * 1024 * 1024,        # headroom for large tiles / larger B (v5e)
        ),
    )(lp, lt, cf, tgt)

    # ---- XLA glue: hard-negative mining as an exact per-row top-k SUM ----
    # TODO(synk): the per-row descending value sort has no Mosaic/Pallas lowering (lax.sort); it is
    # the only large op left outside the kernel (single value sort replaces the old double argsort).
    pos = conf_targets > 0
    num_pos_row = jnp.sum(pos.astype(jnp.int32), axis=1)                  # (B,)
    total_pos = jnp.sum(num_pos_row)
    num_neg = jnp.minimum(3 * num_pos_row, N - 1).astype(jnp.int32)       # clamp(3*num_pos, max=N-1)

    sorted_desc = -jnp.sort(-mining, axis=1)                              # (B, n_pad)
    prefix = jnp.concatenate(
        [jnp.zeros((B, 1), jnp.float32), jnp.cumsum(sorted_desc, axis=1)], axis=1)
    neg_ce = jnp.sum(jnp.take_along_axis(prefix, num_neg[:, None], axis=1))

    numer = jnp.sum(partials[:, 0, 0]) + neg_ce                           # loc_loss + sum_{pos|neg} ce
    denom = jnp.maximum(total_pos, 1).astype(jnp.float32)
    # num_matched_boxes == 0  ->  loss = 0 (matches the PyTorch early return)
    return jnp.where(total_pos > 0, numer / denom, jnp.float32(0.0))


# ---------------- pure-JAX reference (for correctness check) ----------------

def _reference_loss(loc_preds, loc_targets, conf_preds, conf_targets):
    N = conf_targets.shape[1]
    pos = conf_targets > 0
    num_pos_row = jnp.sum(pos.astype(jnp.int32), axis=1)
    total_pos = jnp.sum(num_pos_row)

    d = loc_preds - loc_targets
    ad = jnp.abs(d)
    sl1 = jnp.where(ad < 1.0, 0.5 * d * d, ad - 0.5)
    loc_loss = jnp.sum(sl1 * pos[:, :, None].astype(jnp.float32))

    c0 = conf_preds[:, :, 0]
    c1 = conf_preds[:, :, 1]
    m = jnp.maximum(c0, c1)
    lse = m + jnp.log(jnp.exp(c0 - m) + jnp.exp(c1 - m))
    x_y = jnp.where(pos, c1, c0)
    ce = lse - x_y

    mining = jnp.where(pos, 0.0, ce)
    idx = jnp.argsort(-mining, axis=1)
    rank = jnp.argsort(idx, axis=1)
    num_neg = jnp.minimum(3 * num_pos_row, N - 1)
    neg = rank < num_neg[:, None]
    sel = jnp.logical_or(pos, neg)
    conf_loss = jnp.sum(jnp.where(sel, ce, 0.0))

    denom = jnp.maximum(total_pos, 1).astype(jnp.float32)
    return jnp.where(total_pos > 0, (loc_loss + conf_loss) / denom, jnp.float32(0.0))


if __name__ == "__main__":
    key = jax.random.PRNGKey(0)
    k1, k2, k3, k4 = jax.random.split(key, 4)
    B, N = 4, 1200  # small stand-in for (batch, 21842) anchors; N not a multiple of 128 on purpose

    loc_preds = jax.random.normal(k1, (B, N, 4), jnp.float32)
    loc_targets = jax.random.normal(k2, (B, N, 4), jnp.float32)
    conf_preds = jax.random.normal(k3, (B, N, 2), jnp.float32)
    conf_targets = (jax.random.uniform(k4, (B, N)) < 0.05).astype(jnp.int32)  # ~5% positives

    # tn_max=512 -> 3 grid tiles + a partially padded last tile (exercises masking + multi-tile grid)
    loss_fn = jax.jit(functools.partial(faceboxloss_forward, tn_max=512))
    loss = loss_fn(loc_preds, loc_targets, conf_preds, conf_targets)
    jax.block_until_ready(loss)

    ref = _reference_loss(loc_preds, loc_targets, conf_preds, conf_targets)
    assert loss.shape == () and loss.dtype == jnp.float32
    assert np.allclose(np.asarray(loss), np.asarray(ref), rtol=1e-2, atol=1e-2), (float(loss), float(ref))
    print("KERNEL_OK")
</pallas_src>

<mosaic_0001>
module attributes {stable_mosaic.version = 11 : i64} {
  func.func @_fused_kernel(%arg0: i32, %arg1: memref<4x4x512xf32, #tpu.memory_space<vmem>>, %arg2: memref<4x4x512xf32, #tpu.memory_space<vmem>>, %arg3: memref<4x2x512xf32, #tpu.memory_space<vmem>>, %arg4: memref<4x512xi32, #tpu.memory_space<vmem>>, %arg5: memref<4x512xf32, #tpu.memory_space<vmem>>, %arg6: memref<1x8x128xf32, #tpu.memory_space<vmem>>) attributes {dimension_semantics = [#tpu.dimension_semantics<parallel>], iteration_bounds = array<i64: 3>, scalar_prefetch = 0 : i64, scratch_operands = 0 : i64, tpu.core_type = #tpu.core_type<tc>, window_params = [{transform_indices = @transform_0, window_bounds = array<i64: 4, 4, 512>}, {transform_indices = @transform_1, window_bounds = array<i64: 4, 4, 512>}, {transform_indices = @transform_2, window_bounds = array<i64: 4, 2, 512>}, {transform_indices = @transform_3, window_bounds = array<i64: 4, 512>}, {transform_indices = @transform_4, window_bounds = array<i64: 4, 512>}, {transform_indices = @transform_5, window_bounds = array<i64: 1, 8, 128>}]} {
    %c0 = arith.constant 0 : index
    %c0_0 = arith.constant 0 : index
    %0 = vector.load %arg4[%c0, %c0_0] : memref<4x512xi32, #tpu.memory_space<vmem>>, vector<4x512xi32>
    %c0_i32 = arith.constant 0 : i32
    %1 = vector.broadcast %c0_i32 : i32 to vector<4x512xi32>
    %2 = arith.cmpi sgt, %0, %1 : vector<4x512xi32>
    %3 = arith.extui %2 : vector<4x512xi1> to vector<4x512xi32>
    %4 = arith.sitofp %3 : vector<4x512xi32> to vector<4x512xf32>
    %c0_1 = arith.constant 0 : index
    %c0_2 = arith.constant 0 : index
    %c0_3 = arith.constant 0 : index
    %5 = vector.load %arg3[%c0_1, %c0_2, %c0_3] : memref<4x2x512xf32, #tpu.memory_space<vmem>>, vector<4x2x512xf32>
    %6 = vector.extract_strided_slice %5 {offsets = [0, 0, 0], sizes = [4, 1, 512], strides = [1, 1, 1]} : vector<4x2x512xf32> to vector<4x1x512xf32>
    %7 = vector.shape_cast %6 : vector<4x1x512xf32> to vector<4x512xf32>
    %8 = vector.extract_strided_slice %5 {offsets = [0, 1, 0], sizes = [4, 1, 512], strides = [1, 1, 1]} : vector<4x2x512xf32> to vector<4x1x512xf32>
    %9 = vector.shape_cast %8 : vector<4x1x512xf32> to vector<4x512xf32>
    %10 = arith.maximumf %7, %9 : vector<4x512xf32>
    %11 = arith.subf %7, %9 : vector<4x512xf32>
    %12 = math.absf %11 : vector<4x512xf32>
    %cst = arith.constant 0.000000e+00 : f32
    %13 = vector.broadcast %cst : f32 to vector<4x512xf32>
    %14 = arith.subf %13, %12 : vector<4x512xf32>
    %15 = math.exp %14 : vector<4x512xf32>
    %cst_4 = arith.constant 1.000000e+00 : f32
    %16 = vector.broadcast %cst_4 : f32 to vector<4x512xf32>
    %17 = arith.addf %16, %15 : vector<4x512xf32>
    %18 = math.log %17 : vector<4x512xf32>
    %19 = arith.addf %10, %18 : vector<4x512xf32>
    %20 = arith.select %2, %9, %7 : vector<4x512xi1>, vector<4x512xf32>
    %21 = arith.subf %19, %20 : vector<4x512xf32>
    %22 = tpu.iota {dimensions = array<i32: 1>} : vector<4x512xi32>
    %c512_i32 = arith.constant 512 : i32
    %23 = arith.muli %arg0, %c512_i32 : i32
    %24 = vector.broadcast %23 : i32 to vector<4x512xi32>
    %25 = arith.addi %22, %24 : vector<4x512xi32>
    %c1200_i32 = arith.constant 1200 : i32
    %26 = vector.broadcast %c1200_i32 : i32 to vector<4x512xi32>
    %27 = arith.cmpi slt, %25, %26 : vector<4x512xi32>
    %cst_5 = arith.constant dense<true> : vector<4x512xi1>
    %28 = arith.xori %2, %cst_5 : vector<4x512xi1>
    %29 = arith.andi %27, %28 : vector<4x512xi1>
    %cst_6 = arith.constant 0.000000e+00 : f32
    %30 = vector.broadcast %cst_6 : f32 to vector<4x512xf32>
    %31 = arith.select %29, %21, %30 : vector<4x512xi1>, vector<4x512xf32>
    %c0_7 = arith.constant 0 : index
    %c0_8 = arith.constant 0 : index
    %32 = vector.load %arg5[%c0_7, %c0_8] : memref<4x512xf32, #tpu.memory_space<vmem>>, vector<4x512xf32>
    tpu.vector_store %arg5[%c0_7, %c0_8], %31 {strides = array<i32>} : memref<4x512xf32, #tpu.memory_space<vmem>>, vector<4x512xf32>,
    %c0_9 = arith.constant 0 : index
    %c0_10 = arith.constant 0 : index
    %c0_11 = arith.constant 0 : index
    %33 = vector.load %arg1[%c0_9, %c0_10, %c0_11] : memref<4x4x512xf32, #tpu.memory_space<vmem>>, vector<4x4x512xf32>
    %c0_12 = arith.constant 0 : index
    %c0_13 = arith.constant 0 : index
    %c0_14 = arith.constant 0 : index
    %34 = vector.load %arg2[%c0_12, %c0_13, %c0_14] : memref<4x4x512xf32, #tpu.memory_space<vmem>>, vector<4x4x512xf32>
    %35 = arith.subf %33, %34 : vector<4x4x512xf32>
    %36 = math.absf %35 : vector<4x4x512xf32>
    %cst_15 = arith.constant 1.000000e+00 : f32
    %37 = vector.broadcast %cst_15 : f32 to vector<4x4x512xf32>
    %38 = arith.cmpf olt, %36, %37 : vector<4x4x512xf32>
    %cst_16 = arith.constant 5.000000e-01 : f32
    %39 = vector.broadcast %cst_16 : f32 to vector<4x4x512xf32>
    %40 = arith.mulf %39, %35 : vector<4x4x512xf32>
    %41 = arith.mulf %40, %35 : vector<4x4x512xf32>
    %cst_17 = arith.constant 5.000000e-01 : f32
    %42 = vector.broadcast %cst_17 : f32 to vector<4x4x512xf32>
    %43 = arith.subf %36, %42 : vector<4x4x512xf32>
    %44 = arith.select %38, %41, %43 : vector<4x4x512xi1>, vector<4x4x512xf32>
    %cst_18 = arith.constant dense<0.000000e+00> : vector<4x512xf32>
    %45 = vector.multi_reduction <add>, %44, %cst_18 [1] : vector<4x4x512xf32> to vector<4x512xf32>
    %46 = arith.addf %45, %21 : vector<4x512xf32>
    %47 = arith.mulf %46, %4 : vector<4x512xf32>
    %48 = vector.shape_cast %47 : vector<4x512xf32> to vector<1x4x512xf32>
    %cst_19 = arith.constant dense<0.000000e+00> : vector<1xf32>
    %49 = vector.multi_reduction <add>, %48, %cst_19 [1, 2] : vector<1x4x512xf32> to vector<1xf32>
    %50 = vector.shape_cast %49 : vector<1xf32> to vector<1x1x1xf32>
    %51 = vector.extract %50[0, 0, 0] : f32 from vector<1x1x1xf32>
    %52 = vector.broadcast %51 : f32 to vector<1x8x128xf32>
    %c0_20 = arith.constant 0 : index
    %c0_21 = arith.constant 0 : index
    %c0_22 = arith.constant 0 : index
    %53 = vector.load %arg6[%c0_20, %c0_21, %c0_22] : memref<1x8x128xf32, #tpu.memory_space<vmem>>, vector<1x8x128xf32>
    tpu.vector_store %arg6[%c0_20, %c0_21, %c0_22], %52 {strides = array<i32>} : memref<1x8x128xf32, #tpu.memory_space<vmem>>, vector<1x8x128xf32>,
    return
  }
  func.func @transform_0(%arg0: i32) -> (i32, i32, i32) {
    %c0_i32 = arith.constant 0 : i32
    %c0_i32_0 = arith.constant 0 : i32
    %c0_i32_1 = arith.constant 0 : i32
    return %c0_i32, %c0_i32_0, %arg0 : i32, i32, i32
  }
  func.func @transform_1(%arg0: i32) -> (i32, i32, i32) {
    %c0_i32 = arith.constant 0 : i32
    %c0_i32_0 = arith.constant 0 : i32
    %c0_i32_1 = arith.constant 0 : i32
    return %c0_i32, %c0_i32_0, %arg0 : i32, i32, i32
  }
  func.func @transform_2(%arg0: i32) -> (i32, i32, i32) {
    %c0_i32 = arith.constant 0 : i32
    %c0_i32_0 = arith.constant 0 : i32
    %c0_i32_1 = arith.constant 0 : i32
    return %c0_i32, %c0_i32_0, %arg0 : i32, i32, i32
  }
  func.func @transform_3(%arg0: i32) -> (i32, i32) {
    %c0_i32 = arith.constant 0 : i32
    %c0_i32_0 = arith.constant 0 : i32
    return %c0_i32, %arg0 : i32, i32
  }
  func.func @transform_4(%arg0: i32) -> (i32, i32) {
    %c0_i32 = arith.constant 0 : i32
    %c0_i32_0 = arith.constant 0 : i32
    return %c0_i32, %arg0 : i32, i32
  }
  func.func @transform_5(%arg0: i32) -> (i32, i32, i32) {
    %c0_i32 = arith.constant 0 : i32
    %c0_i32_0 = arith.constant 0 : i32
    %c0_i32_1 = arith.constant 0 : i32
    return %arg0, %c0_i32, %c0_i32_0 : i32, i32, i32
  }
}

</mosaic_0001>

<llo_original>
// kernel: neg.2
$region0: #{neg.2}
  #allocation0 [shape = 's32[1]{0}', space=sflag, size = 0x4, scoped, tag = 'scoped memory for neg.2']
  %s0 = inlined_call_operand.vmem [shape: f32[4,1536], index: 0, kind: input, shape index: {}]
  %s1 = inlined_call_operand.vmem [shape: f32[4,1536], index: 1, kind: output, shape index: {}]
  %v2 = vld [vmem:[%s0] sm:$0xf]
  %3 = xla_tuple %v2
  %4 = xla_tuple %3
  %v5 = vxor.u32 %v2, 2147483648
  %6 = xla_tuple %v5
  %7 = vst [vmem:[%s1] sm:$0xf] %v5
  %s8 = scalar_lea.vmem %s0, 4
  %v9 = vld [vmem:[%s8] sm:$0xf]
  %10 = xla_tuple %v9
  %11 = xla_tuple %10
  %v12 = vxor.u32 %v9, 2147483648
  %13 = xla_tuple %v12
  %s14 = scalar_lea.vmem %s1, 4
  %15 = vst [vmem:[%s14] sm:$0xf] %v12
  %s16 = scalar_lea.vmem %s0, 8
  %v17 = vld [vmem:[%s16] sm:$0xf]
  %18 = xla_tuple %v17
  %19 = xla_tuple %18
  %v20 = vxor.u32 %v17, 2147483648
  %21 = xla_tuple %v20
  %s22 = scalar_lea.vmem %s1, 8
  %23 = vst [vmem:[%s22] sm:$0xf] %v20
  %s24 = scalar_lea.vmem %s0, 12
  %v25 = vld [vmem:[%s24] sm:$0xf]
  %26 = xla_tuple %v25
  %27 = xla_tuple %26
  %v28 = vxor.u32 %v25, 2147483648
  %29 = xla_tuple %v28
  %s30 = scalar_lea.vmem %s1, 12
  %31 = vst [vmem:[%s30] sm:$0xf] %v28
  %s32 = scalar_lea.vmem %s0, 16
  %v33 = vld [vmem:[%s32] sm:$0xf]
  %34 = xla_tuple %v33
  %35 = xla_tuple %34
  %v36 = vxor.u32 %v33, 2147483648
  %37 = xla_tuple %v36
  %s38 = scalar_lea.vmem %s1, 16
  %39 = vst [vmem:[%s38] sm:$0xf] %v36
  %s40 = scalar_lea.vmem %s0, 20
  %v41 = vld [vmem:[%s40] sm:$0xf]
  %42 = xla_tuple %v41
  %43 = xla_tuple %42
  %v44 = vxor.u32 %v41, 2147483648
  %45 = xla_tuple %v44
  %s46 = scalar_lea.vmem %s1, 20
  %47 = vst [vmem:[%s46] sm:$0xf] %v44
  %s48 = scalar_lea.vmem %s0, 24
  %v49 = vld [vmem:[%s48] sm:$0xf]
  %50 = xla_tuple %v49
  %51 = xla_tuple %50
  %v52 = vxor.u32 %v49, 2147483648
  %53 = xla_tuple %v52
  %s54 = scalar_lea.vmem %s1, 24
  %55 = vst [vmem:[%s54] sm:$0xf] %v52
  %s56 = scalar_lea.vmem %s0, 28
  %v57 = vld [vmem:[%s56] sm:$0xf]
  %58 = xla_tuple %v57
  %59 = xla_tuple %58
  %v60 = vxor.u32 %v57, 2147483648
  %61 = xla_tuple %v60
  %s62 = scalar_lea.vmem %s1, 28
  %63 = vst [vmem:[%s62] sm:$0xf] %v60
  %s64 = scalar_lea.vmem %s0, 32
  %v65 = vld [vmem:[%s64] sm:$0xf]
  %66 = xla_tuple %v65
  %67 = xla_tuple %66
  %v68 = vxor.u32 %v65, 2147483648
  %69 = xla_tuple %v68
  %s70 = scalar_lea.vmem %s1, 32
  %71 = vst [vmem:[%s70] sm:$0xf] %v68
  %s72 = scalar_lea.vmem %s0, 36
  %v73 = vld [vmem:[%s72] sm:$0xf]
  %74 = xla_tuple %v73
  %75 = xla_tuple %74
  %v76 = vxor.u32 %v73, 2147483648
  %77 = xla_tuple %v76
  %s78 = scalar_lea.vmem %s1, 36
  %79 = vst [vmem:[%s78] sm:$0xf] %v76
  %s80 = scalar_lea.vmem %s0, 40
  %v81 = vld [vmem:[%s80] sm:$0xf]
  %82 = xla_tuple %v81
  %83 = xla_tuple %82
  %v84 = vxor.u32 %v81, 2147483648
  %85 = xla_tuple %v84
  %s86 = scalar_lea.vmem %s1, 40
  %87 = vst [vmem:[%s86] sm:$0xf] %v84
  %s88 = scalar_lea.vmem %s0, 44
  %v89 = vld [vmem:[%s88] sm:$0xf]
  %90 = xla_tuple %v89
  %91 = xla_tuple %90
  %v92 = vxor.u32 %v89, 2147483648
  %93 = xla_tuple %v92
  %s94 = scalar_lea.vmem %s1, 44
  %95 = vst [vmem:[%s94] sm:$0xf] %v92

// kernel: faceboxloss_forward.1
$region0: #{faceboxloss_forward.1}
  #allocation0 [shape = 'u32[]', space=smem, size = 0x4, offset = 0x4, fixed_abs, tag = 'smem constant byte address 0x4 - core index']
  #allocation1 [shape = 'u32[144,128]{1,0:T(1,128)}', space=vmem, size = 0x12000, scoped, tag = 'internal scratch']
  %s0 = inlined_call_operand.vmem [shape: f32[4,4,1536], index: 0, kind: input, shape index: {}]
  %s1 = inlined_call_operand.vmem [shape: f32[4,4,1536], index: 1, kind: input, shape index: {}]
  %s2 = inlined_call_operand.vmem [shape: f32[4,2,1536], index: 2, kind: input, shape index: {}]
  %s3 = inlined_call_operand.vmem [shape: s32[4,1536], index: 3, kind: input, shape index: {}]
  %s4 = inlined_call_operand.vmem [shape: f32[4,1536], index: 4, kind: output, shape index: {0}]
  %s5 = inlined_call_operand.vmem [shape: f32[3,8,128], index: 5, kind: output, shape index: {1}]
  %6 = xla_tuple %s4, %s5
  %s7 = sld [smem:[#allocation0]]
  $region141: #{faceboxloss_forward.1} parent=0
    _
  %s9 = ssub.s32 1, %s7
  %s10 = scalar_select 0, %s9, %s7
  $region1: #{faceboxloss_forward.1} parent=0
    #allocation2 [shape = 'u8[65536]{0}', space=vmem, size = 0x10000, scoped, tag = 'input window, operand 0']
    #allocation3 [shape = 'u8[65536]{0}', space=vmem, size = 0x10000, scoped, tag = 'input window, operand 1']
    #allocation4 [shape = 'u8[32768]{0}', space=vmem, size = 0x8000, scoped, tag = 'input window, operand 2']
    loop: start=0, step=1, limit=5
    $region2: #{faceboxloss_forward.1} parent=1 // loop_pre_header
      _
    $region3: #{faceboxloss_forward.1} parent=1 // loop_header
      %s12 = sphi 0, %s16
      %p13 = scmp.ge.s32.totalorder %s12, 5
      %s22 = sphi 0, %s24
      %s25 = sphi 0, %s22
      %s26 = sphi 0, %s25
      %s42 = sphi 0, %s26
      %s48 = sphi 0, %s50
      %s51 = sphi 0, %s48
      %s52 = sphi 0, %s51
      %s68 = sphi 0, %s52
      %s74 = sphi 0, %s76
      %s77 = sphi 0, %s74
      %s78 = sphi 0, %s77
      %s94 = sphi 0, %s78
      %s100 = sphi 0, %s102
      %s103 = sphi 0, %s100
      %s104 = sphi 0, %s103
      %s120 = sphi 0, %s104
      %s126 = sphi 0, %s128
      %s129 = sphi 0, %s126
      %s130 = sphi 0, %s129
      %s146 = sphi 0, %s130
      %s152 = sphi 0, %s154
      %s155 = sphi 0, %s152
      %s156 = sphi 0, %s155
      %s172 = sphi 0, %s156
    $region4: #{faceboxloss_forward.1} parent=1 // loop_header_branch
      %15 = sbr.rel (%p13) target = $region8
    $region5: #{faceboxloss_forward.1} parent=1 // loop_body
      %s17 = ssub.s32 %s12, 1
      %s18 = ssub.s32 %s12, 2
      %s19 = sadd.s32 %s12, 1
      %s20 = ssub.s32 %s12, %s19
      %p21 = scmp.eq.s32.totalorder %s20, 0
      %s23 = sadd.s32 %s22, 1
      %s24 = scalar_select %p21, %s22, %s23
      %p27 = pneg %p21
      %p28 = scmp.eq.s32.totalorder %s12, 2
      %p29 = por %p27, %p28
      %p30 = scmp.ne.s32.totalorder %s22, %s25
      %p31 = scmp.eq.s32.totalorder %s12, 0
      %p32 = por %p30, %p31
      %p33 = scmp.ne.s32.totalorder %s22, %s25
      %p34 = scmp.eq.s32.totalorder %s17, 2
      %p35 = por %p33, %p34
      %p36 = scmp.ne.s32.totalorder %s25, %s26
      %p37 = scmp.eq.s32.totalorder %s17, 0
      %p38 = por %p36, %p37
      %p39 = scmp.ne.s32.totalorder %s25, %s26
      %p40 = scmp.eq.s32.totalorder %s18, 2
      %p41 = por %p39, %p40
      %p43 = scmp.ne.s32.totalorder %s26, %s42
      %p44 = scmp.eq.s32.totalorder %s18, 0
      %p45 = por %p43, %p44
      %s46 = ssub.s32 %s12, %s19
      %p47 = scmp.eq.s32.totalorder %s46, 0
      %s49 = sadd.s32 %s48, 1
      %s50 = scalar_select %p47, %s48, %s49
      %p53 = pneg %p47
      %p54 = scmp.eq.s32.totalorder %s12, 2
      %p55 = por %p53, %p54
      %p56 = scmp.ne.s32.totalorder %s48, %s51
      %p57 = scmp.eq.s32.totalorder %s12, 0
      %p58 = por %p56, %p57
      %p59 = scmp.ne.s32.totalorder %s48, %s51
      %p60 = scmp.eq.s32.totalorder %s17, 2
      %p61 = por %p59, %p60
      %p62 = scmp.ne.s32.totalorder %s51, %s52
      %p63 = scmp.eq.s32.totalorder %s17, 0
      %p64 = por %p62, %p63
      %p65 = scmp.ne.s32.totalorder %s51, %s52
      %p66 = scmp.eq.s32.totalorder %s18, 2
      %p67 = por %p65, %p66
      %p69 = scmp.ne.s32.totalorder %s52, %s68
      %p70 = scmp.eq.s32.totalorder %s18, 0
      %p71 = por %p69, %p70
      %s72 = ssub.s32 %s12, %s19
      %p73 = scmp.eq.s32.totalorder %s72, 0
      %s75 = sadd.s32 %s74, 1
      %s76 = scalar_select %p73, %s74, %s75
      %p79 = pneg %p73
      %p80 = scmp.eq.s32.totalorder %s12, 2
      %p81 = por %p79, %p80
      %p82 = scmp.ne.s32.totalorder %s74, %s77
      %p83 = scmp.eq.s32.totalorder %s12, 0
      %p84 = por %p82, %p83
      %p85 = scmp.ne.s32.totalorder %s74, %s77
      %p86 = scmp.eq.s32.totalorder %s17, 2
      %p87 = por %p85, %p86
      %p88 = scmp.ne.s32.totalorder %s77, %s78
      %p89 = scmp.eq.s32.totalorder %s17, 0
      %p90 = por %p88, %p89
      %p91 = scmp.ne.s32.totalorder %s77, %s78
      %p92 = scmp.eq.s32.totalorder %s18, 2
      %p93 = por %p91, %p92
      %p95 = scmp.ne.s32.totalorder %s78, %s94
      %p96 = scmp.eq.s32.totalorder %s18, 0
      %p97 = por %p95, %p96
      %s98 = ssub.s32 %s12, %s19
      %p99 = scmp.eq.s32.totalorder %s98, 0
      %s101 = sadd.s32 %s100, 1
      %s102 = scalar_select %p99, %s100, %s101
      %p105 = pneg %p99
      %p106 = scmp.eq.s32.totalorder %s12, 2
      %p107 = por %p105, %p106
      %p108 = scmp.ne.s32.totalorder %s100, %s103
      %p109 = scmp.eq.s32.totalorder %s12, 0
      %p110 = por %p108, %p109
      %p111 = scmp.ne.s32.totalorder %s100, %s103
      %p112 = scmp.eq.s32.totalorder %s17, 2
      %p113 = por %p111, %p112
      %p114 = scmp.ne.s32.totalorder %s103, %s104
      %p115 = scmp.eq.s32.totalorder %s17, 0
      %p116 = por %p114, %p115
      %p117 = scmp.ne.s32.totalorder %s103, %s104
      %p118 = scmp.eq.s32.totalorder %s18, 2
      %p119 = por %p117, %p118
      %p121 = scmp.ne.s32.totalorder %s104, %s120
      %p122 = scmp.eq.s32.totalorder %s18, 0
      %p123 = por %p121, %p122
      %s124 = ssub.s32 %s12, %s19
      %p125 = scmp.eq.s32.totalorder %s124, 0
      %s127 = sadd.s32 %s126, 1
      %s128 = scalar_select %p125, %s126, %s127
      %p131 = pneg %p125
      %p132 = scmp.eq.s32.totalorder %s12, 2
      %p133 = por %p131, %p132
      %p134 = scmp.ne.s32.totalorder %s126, %s129
      %p135 = scmp.eq.s32.totalorder %s12, 0
      %p136 = por %p134, %p135
      %p137 = scmp.ne.s32.totalorder %s126, %s129
      %p138 = scmp.eq.s32.totalorder %s17, 2
      %p139 = por %p137, %p138
      %p140 = scmp.ne.s32.totalorder %s129, %s130
      %p141 = scmp.eq.s32.totalorder %s17, 0
      %p142 = por %p140, %p141
      %p143 = scmp.ne.s32.totalorder %s129, %s130
      %p144 = scmp.eq.s32.totalorder %s18, 2
      %p145 = por %p143, %p144
      %p147 = scmp.ne.s32.totalorder %s130, %s146
      %p148 = scmp.eq.s32.totalorder %s18, 0
      %p149 = por %p147, %p148
      %s150 = ssub.s32 %s12, %s19
      %p151 = scmp.eq.s32.totalorder %s150, 0
      %s153 = sadd.s32 %s152, 1
      %s154 = scalar_select %p151, %s152, %s153
      %p157 = pneg %p151
      %p158 = scmp.eq.s32.totalorder %s12, 2
      %p159 = por %p157, %p158
      %p160 = scmp.ne.s32.totalorder %s152, %s155
      %p161 = scmp.eq.s32.totalorder %s12, 0
      %p162 = por %p160, %p161
      %p163 = scmp.ne.s32.totalorder %s152, %s155
      %p164 = scmp.eq.s32.totalorder %s17, 2
      %p165 = por %p163, %p164
      %p166 = scmp.ne.s32.totalorder %s155, %s156
      %p167 = scmp.eq.s32.totalorder %s17, 0
      %p168 = por %p166, %p167
      %p169 = scmp.ne.s32.totalorder %s155, %s156
      %p170 = scmp.eq.s32.totalorder %s18, 2
      %p171 = por %p169, %p170
      %p173 = scmp.ne.s32.totalorder %s156, %s172
      %p174 = scmp.eq.s32.totalorder %s18, 0
      %p175 = por %p173, %p174
      %p176 = scmp.le.s32.totalorder 1, %s12
      %p177 = scmp.lt.s32.totalorder %s12, 4
      %p178 = pnand %p176, %p177
      %p179 = pneg %p178
      // Predicated region
      $region9: #{faceboxloss_forward.1} parent=5 // pred_check
        _
      $region10: #{faceboxloss_forward.1} parent=5 // pred_check_branch
        %181 = sbr.rel (%p178) target = $region12
      $region11: #{faceboxloss_forward.1} parent=5 // pred_region
        %s182 = ssub.s32 %s12, 1
      $region12: #{faceboxloss_forward.1} parent=5 // pred_fallthru
        _
      %p183 = scmp.lt.s32.totalorder %s12, 3
      // Predicated region
      $region13: #{faceboxloss_forward.1} parent=5 // pred_check
        %p184 = pneg %p183
      $region14: #{faceboxloss_forward.1} parent=5 // pred_check_branch
        %186 = sbr.rel (%p184) target = $region16
      $region15: #{faceboxloss_forward.1} parent=5 // pred_region
        // Predicated region
        $region17: #{faceboxloss_forward.1} parent=15 // pred_check
          %p187 = pneg %p32
        $region18: #{faceboxloss_forward.1} parent=15 // pred_check_branch
          %189 = sbr.rel (%p187) target = $region20
        $region19: #{faceboxloss_forward.1} parent=15 // pred_region
          %s190 = sand.u32 %s22, 1
          %s191 = sand.u32 %s22, 1
          %s192 = smul.addr %s191, 64
          %s193 = scalar_lea.vmem [#allocation2], %s192
          %s194 = smul.u32 4, %s12
          %s195 = smul.addr %s194, 4
          %s196 = scalar_lea.vmem %s0, %s195
          // Predicated region
          $region21: #{faceboxloss_forward.1} parent=19 // pred_check
            _
          $region22: #{faceboxloss_forward.1} parent=19 // pred_check_branch
            %198 = sbr.rel (0) target = $region24
          $region23: #{faceboxloss_forward.1} parent=19 // pred_region
            // Predicated region
            $region25: #{faceboxloss_forward.1} parent=23 // pred_check
              _
            $region26: #{faceboxloss_forward.1} parent=23 // pred_check_branch
              %200 = sbr.rel (0) target = $region28
            $region27: #{faceboxloss_forward.1} parent=23 // pred_region
              loop: start=0, step=1, limit=1
              $region29: #{faceboxloss_forward.1} parent=27 // loop_pre_header
                _
              $region30: #{faceboxloss_forward.1} parent=27 // loop_header
                %s202 = sphi 0, %s206
                %p203 = scmp.ge.s32.totalorder %s202, 1
                %s207 = sphi %s196, %s196
                %s208 = sphi %s193, %s193
              $region31: #{faceboxloss_forward.1} parent=27 // loop_header_branch
                %205 = sbr.rel (%p203) target = $region35
              $region32: #{faceboxloss_forward.1} parent=27 // loop_body
                %v209 = vld [vmem:[%s207] sm:$0xff]
                %210 = vst [vmem:[%s208] sm:$0xff] %v209
                %v211 = vld [vmem:[%s207 + $0x8] sm:$0xff]
                %212 = vst [vmem:[%s208 + $0x8] sm:$0xff] %v211
                %v213 = vld [vmem:[%s207 + $0x30] sm:$0xff]
                %214 = vst [vmem:[%s208 + $0x10] sm:$0xff] %v213
                %v215 = vld [vmem:[%s207 + $0x38] sm:$0xff]
                %216 = vst [vmem:[%s208 + $0x18] sm:$0xff] %v215
                %v217 = vld [vmem:[%s207 + $0x60] sm:$0xff]
                %218 = vst [vmem:[%s208 + $0x20] sm:$0xff] %v217
                %v219 = vld [vmem:[%s207 + $0x68] sm:$0xff]
                %220 = vst [vmem:[%s208 + $0x28] sm:$0xff] %v219
                %v221 = vld [vmem:[%s207 + $0x90] sm:$0xff]
                %222 = vst [vmem:[%s208 + $0x30] sm:$0xff] %v221
                %v223 = vld [vmem:[%s207 + $0x98] sm:$0xff]
                %224 = vst [vmem:[%s208 + $0x38] sm:$0xff] %v223
              $region33: #{faceboxloss_forward.1} parent=27 // loop_footer
                %s206 = sadd.s32 1, %s202
              $region34: #{faceboxloss_forward.1} parent=27 // loop_footer_branch
                %201 = sbr.rel target = $region30
              $region35: #{faceboxloss_forward.1} parent=27 // loop_exit
                _
            $region28: #{faceboxloss_forward.1} parent=23 // pred_fallthru
              _
            // Predicated region
            $region36: #{faceboxloss_forward.1} parent=23 // pred_check
              _
            $region37: #{faceboxloss_forward.1} parent=23 // pred_check_branch
              %226 = sbr.rel target = $region39
            $region38: #{faceboxloss_forward.1} parent=23 // pred_region
              _
            $region39: #{faceboxloss_forward.1} parent=23 // pred_fallthru
              _
          $region24: #{faceboxloss_forward.1} parent=19 // pred_fallthru
            _
          %227 = vnop
        $region20: #{faceboxloss_forward.1} parent=15 // pred_fallthru
          _
        // Predicated region
        $region40: #{faceboxloss_forward.1} parent=15 // pred_check
          %p228 = pneg %p58
        $region41: #{faceboxloss_forward.1} parent=15 // pred_check_branch
          %230 = sbr.rel (%p228) target = $region43
        $region42: #{faceboxloss_forward.1} parent=15 // pred_region
          %s231 = sand.u32 %s48, 1
          %s232 = sand.u32 %s48, 1
          %s233 = smul.addr %s232, 64
          %s234 = scalar_lea.vmem [#allocation3], %s233
          %s235 = smul.u32 4, %s12
          %s236 = smul.addr %s235, 4
          %s237 = scalar_lea.vmem %s1, %s236
          // Predicated region
          $region44: #{faceboxloss_forward.1} parent=42 // pred_check
            _
          $region45: #{faceboxloss_forward.1} parent=42 // pred_check_branch
            %239 = sbr.rel (0) target = $region47
          $region46: #{faceboxloss_forward.1} parent=42 // pred_region
            // Predicated region
            $region48: #{faceboxloss_forward.1} parent=46 // pred_check
              _
            $region49: #{faceboxloss_forward.1} parent=46 // pred_check_branch
              %241 = sbr.rel (0) target = $region51
            $region50: #{faceboxloss_forward.1} parent=46 // pred_region
              loop: start=0, step=1, limit=1
              $region52: #{faceboxloss_forward.1} parent=50 // loop_pre_header
                _
              $region53: #{faceboxloss_forward.1} parent=50 // loop_header
                %s243 = sphi 0, %s247
                %p244 = scmp.ge.s32.totalorder %s243, 1
                %s248 = sphi %s237, %s237
                %s249 = sphi %s234, %s234
              $region54: #{faceboxloss_forward.1} parent=50 // loop_header_branch
                %246 = sbr.rel (%p244) target = $region58
              $region55: #{faceboxloss_forward.1} parent=50 // loop_body
                %v250 = vld [vmem:[%s248] sm:$0xff]
                %251 = vst [vmem:[%s249] sm:$0xff] %v250
                %v252 = vld [vmem:[%s248 + $0x8] sm:$0xff]
                %253 = vst [vmem:[%s249 + $0x8] sm:$0xff] %v252
                %v254 = vld [vmem:[%s248 + $0x30] sm:$0xff]
                %255 = vst [vmem:[%s249 + $0x10] sm:$0xff] %v254
                %v256 = vld [vmem:[%s248 + $0x38] sm:$0xff]
                %257 = vst [vmem:[%s249 + $0x18] sm:$0xff] %v256
                %v258 = vld [vmem:[%s248 + $0x60] sm:$0xff]
                %259 = vst [vmem:[%s249 + $0x20] sm:$0xff] %v258
                %v260 = vld [vmem:[%s248 + $0x68] sm:$0xff]
                %261 = vst [vmem:[%s249 + $0x28] sm:$0xff] %v260
                %v262 = vld [vmem:[%s248 + $0x90] sm:$0xff]
                %263 = vst [vmem:[%s249 + $0x30] sm:$0xff] %v262
                %v264 = vld [vmem:[%s248 + $0x98] sm:$0xff]
                %265 = vst [vmem:[%s249 + $0x38] sm:$0xff] %v264
              $region56: #{faceboxloss_forward.1} parent=50 // loop_footer
                %s247 = sadd.s32 1, %s243
              $region57: #{faceboxloss_forward.1} parent=50 // loop_footer_branch
                %242 = sbr.rel target = $region53
              $region58: #{faceboxloss_forward.1} parent=50 // loop_exit
                _
            $region51: #{faceboxloss_forward.1} parent=46 // pred_fallthru
              _
            // Predicated region
            $region59: #{faceboxloss_forward.1} parent=46 // pred_check
              _
            $region60: #{faceboxloss_forward.1} parent=46 // pred_check_branch
              %267 = sbr.rel target = $region62
            $region61: #{faceboxloss_forward.1} parent=46 // pred_region
              _
            $region62: #{faceboxloss_forward.1} parent=46 // pred_fallthru
              _
          $region47: #{faceboxloss_forward.1} parent=42 // pred_fallthru
            _
          %268 = vnop
        $region43: #{faceboxloss_forward.1} parent=15 // pred_fallthru
          _
        // Predicated region
        $region63: #{faceboxloss_forward.1} parent=15 // pred_check
          %p269 = pneg %p84
        $region64: #{faceboxloss_forward.1} parent=15 // pred_check_branch
          %271 = sbr.rel (%p269) target = $region66
        $region65: #{faceboxloss_forward.1} parent=15 // pred_region
          %s272 = sand.u32 %s74, 1
          %s273 = sand.u32 %s74, 1
          %s274 = smul.addr %s273, 32
          %s275 = scalar_lea.vmem [#allocation4], %s274
          %s276 = smul.u32 4, %s12
          %s277 = smul.addr %s276, 2
          %s278 = scalar_lea.vmem %s2, %s277
          // Predicated region
          $region67: #{faceboxloss_forward.1} parent=65 // pred_check
            _
          $region68: #{faceboxloss_forward.1} parent=65 // pred_check_branch
            %280 = sbr.rel (0) target = $region70
          $region69: #{faceboxloss_forward.1} parent=65 // pred_region
            // Predicated region
            $region71: #{faceboxloss_forward.1} parent=69 // pred_check
              _
            $region72: #{faceboxloss_forward.1} parent=69 // pred_check_branch
              %282 = sbr.rel (0) target = $region74
            $region73: #{faceboxloss_forward.1} parent=69 // pred_region
              // Predicated region
              $region86: #{faceboxloss_forward.1} parent=73 // pred_check
                _
              $region87: #{faceboxloss_forward.1} parent=73 // pred_check_branch
                %303 = sbr.rel (0) target = $region89
              $region88: #{faceboxloss_forward.1} parent=73 // pred_region
                loop: start=0, step=1, limit=1
                $region90: #{faceboxloss_forward.1} parent=88 // loop_pre_header
                  _
                $region91: #{faceboxloss_forward.1} parent=88 // loop_header
                  %s305 = sphi 0, %s309
                  %p306 = scmp.ge.s32.totalorder %s305, 1
                  %s310 = sphi %s278, %s278
                  %s311 = sphi %s275, %s275
                $region92: #{faceboxloss_forward.1} parent=88 // loop_header_branch
                  %308 = sbr.rel (%p306) target = $region96
                $region93: #{faceboxloss_forward.1} parent=88 // loop_body
                  %v312 = vld [vmem:[%s310] sm:$0xff]
                  %313 = vst [vmem:[%s311] sm:$0xff] %v312
                  %v314 = vld [vmem:[%s310 + $0x18] sm:$0xff]
                  %315 = vst [vmem:[%s311 + $0x8] sm:$0xff] %v314
                  %v316 = vld [vmem:[%s310 + $0x30] sm:$0xff]
                  %317 = vst [vmem:[%s311 + $0x10] sm:$0xff] %v316
                  %v318 = vld [vmem:[%s310 + $0x48] sm:$0xff]
                  %319 = vst [vmem:[%s311 + $0x18] sm:$0xff] %v318
                $region94: #{faceboxloss_forward.1} parent=88 // loop_footer
                  %s309 = sadd.s32 1, %s305
                $region95: #{faceboxloss_forward.1} parent=88 // loop_footer_branch
                  %304 = sbr.rel target = $region91
                $region96: #{faceboxloss_forward.1} parent=88 // loop_exit
                  _
              $region89: #{faceboxloss_forward.1} parent=73 // pred_fallthru
                _
              // Predicated region
              $region97: #{faceboxloss_forward.1} parent=73 // pred_check
                _
              $region98: #{faceboxloss_forward.1} parent=73 // pred_check_branch
                %321 = sbr.rel target = $region100
              $region99: #{faceboxloss_forward.1} parent=73 // pred_region
                _
              $region100: #{faceboxloss_forward.1} parent=73 // pred_fallthru
                _
            $region74: #{faceboxloss_forward.1} parent=69 // pred_fallthru
              _
            // Predicated region
            $region75: #{faceboxloss_forward.1} parent=69 // pred_check
              _
            $region76: #{faceboxloss_forward.1} parent=69 // pred_check_branch
              %284 = sbr.rel target = $region78
            $region77: #{faceboxloss_forward.1} parent=69 // pred_region
              loop: start=0, step=1, limit=1
              $region79: #{faceboxloss_forward.1} parent=77 // loop_pre_header
                _
              $region80: #{faceboxloss_forward.1} parent=77 // loop_header
                %s287 = sphi 0, %s291
                %p288 = scmp.ge.s32.totalorder %s287, 1
                %s292 = sphi %s278, %s278
                %s293 = sphi %s275, %s275
              $region81: #{faceboxloss_forward.1} parent=77 // loop_header_branch
                %290 = sbr.rel (%p288) target = $region85
              $region82: #{faceboxloss_forward.1} parent=77 // loop_body
                %v294 = vld [vmem:[%s292] sm:$0xff]
                %295 = vst [vmem:[%s293] sm:$0xff] %v294
                %v296 = vld [vmem:[%s292 + $0x18] sm:$0xff]
                %297 = vst [vmem:[%s293 + $0x8] sm:$0xff] %v296
                %v298 = vld [vmem:[%s292 + $0x30] sm:$0xff]
                %299 = vst [vmem:[%s293 + $0x10] sm:$0xff] %v298
                %v300 = vld [vmem:[%s292 + $0x48] sm:$0xff]
                %301 = vst [vmem:[%s293 + $0x18] sm:$0xff] %v300
              $region83: #{faceboxloss_forward.1} parent=77 // loop_footer
                %s291 = sadd.s32 1, %s287
              $region84: #{faceboxloss_forward.1} parent=77 // loop_footer_branch
                %286 = sbr.rel target = $region80
              $region85: #{faceboxloss_forward.1} parent=77 // loop_exit
                _
            $region78: #{faceboxloss_forward.1} parent=69 // pred_fallthru
              _
          $region70: #{faceboxloss_forward.1} parent=65 // pred_fallthru
            _
          %322 = vnop
        $region66: #{faceboxloss_forward.1} parent=15 // pred_fallthru
          _
        // Predicated region
        $region101: #{faceboxloss_forward.1} parent=15 // pred_check
          %p323 = pneg %p110
        $region102: #{faceboxloss_forward.1} parent=15 // pred_check_branch
          %325 = sbr.rel (%p323) target = $region104
        $region103: #{faceboxloss_forward.1} parent=15 // pred_region
          %s326 = smul.u32 4, %s12
          %p327 = scmp.lt.s32.totalorder %s326, 11
          %s328 = scalar_select %p327, %s326, 11
          %s329 = smul.addr %s328, 4
          %s330 = scalar_lea.vmem %s3, %s329
          %s331 = smul.u32 4, %s12
        $region104: #{faceboxloss_forward.1} parent=15 // pred_fallthru
          _
      $region16: #{faceboxloss_forward.1} parent=5 // pred_fallthru
        _
      %p332 = scmp.le.s32.totalorder 1, %s12
      %p333 = scmp.lt.s32.totalorder %s12, 4
      %p334 = pnand %p332, %p333
      %p335 = pneg %p334
      // Predicated region
      $region105: #{faceboxloss_forward.1} parent=5 // pred_check
        _
      $region106: #{faceboxloss_forward.1} parent=5 // pred_check_branch
        %337 = sbr.rel (%p334) target = $region108
      $region107: #{faceboxloss_forward.1} parent=5 // pred_region
        %s338 = ssub.s32 %s12, 1
        %s339 = sand.u32 %s25, 1
        %s340 = sand.u32 %s25, 1
        %s341 = smul.addr %s340, 64
        %s342 = scalar_lea.vmem [#allocation2], %s341
        // Predicated region
        $region109: #{faceboxloss_forward.1} parent=107 // pred_check
          %p343 = pneg %p38
        $region110: #{faceboxloss_forward.1} parent=107 // pred_check_branch
          %345 = sbr.rel (%p343) target = $region112
        $region111: #{faceboxloss_forward.1} parent=107 // pred_region
          _
        $region112: #{faceboxloss_forward.1} parent=107 // pred_fallthru
          _
        %s346 = sand.u32 %s51, 1
        %s347 = sand.u32 %s51, 1
        %s348 = smul.addr %s347, 64
        %s349 = scalar_lea.vmem [#allocation3], %s348
        // Predicated region
        $region113: #{faceboxloss_forward.1} parent=107 // pred_check
          %p350 = pneg %p64
        $region114: #{faceboxloss_forward.1} parent=107 // pred_check_branch
          %352 = sbr.rel (%p350) target = $region116
        $region115: #{faceboxloss_forward.1} parent=107 // pred_region
          _
        $region116: #{faceboxloss_forward.1} parent=107 // pred_fallthru
          _
        %s353 = sand.u32 %s77, 1
        %s354 = sand.u32 %s77, 1
        %s355 = smul.addr %s354, 32
        %s356 = scalar_lea.vmem [#allocation4], %s355
        // Predicated region
        $region117: #{faceboxloss_forward.1} parent=107 // pred_check
          %p357 = pneg %p90
        $region118: #{faceboxloss_forward.1} parent=107 // pred_check_branch
          %359 = sbr.rel (%p357) target = $region120
        $region119: #{faceboxloss_forward.1} parent=107 // pred_region
          _
        $region120: #{faceboxloss_forward.1} parent=107 // pred_fallthru
          _
        %s360 = sand.u32 %s25, 1
        %s361 = sand.u32 %s25, 1
        %s362 = smul.addr %s361, 64
        %s363 = scalar_lea.vmem [#allocation2], %s362
        %p364 = pneg %p38
        %p365 = pneg %p35
        %s366 = sand.u32 %s51, 1
        %s367 = sand.u32 %s51, 1
        %s368 = smul.addr %s367, 64
        %s369 = scalar_lea.vmem [#allocation3], %s368
        %p370 = pneg %p64
        %p371 = pneg %p61
        %s372 = sand.u32 %s77, 1
        %s373 = sand.u32 %s77, 1
        %s374 = smul.addr %s373, 32
        %s375 = scalar_lea.vmem [#allocation4], %s374
        %p376 = pneg %p90
        %p377 = pneg %p87
        %s378 = smul.u32 4, %s17
        %p379 = scmp.lt.s32.totalorder %s378, 11
        %s380 = scalar_select %p379, %s378, 11
        %s381 = smul.addr %s380, 4
        %s382 = scalar_lea.vmem %s3, %s381
        %p383 = pneg %p116
        %p384 = pneg %p113
        %p385 = pneg %p142
        %p386 = pneg %p139
        %s387 = smul.u32 4, %s17
        %p388 = scmp.lt.s32.totalorder %s387, 11
        %s389 = scalar_select %p388, %s387, 11
        %s390 = smul.addr %s389, 4
        %s391 = scalar_lea.vmem %s4, %s390
        %p392 = pneg %p168
        %p393 = pneg %p165
        %p394 = scmp.lt.s32.totalorder %s17, 2
        %s395 = scalar_select %p394, %s17, 2
        %s396 = smul.addr %s395, 8
        %s397 = scalar_lea.vmem %s5, %s396
        %s398 = smul.u32 4, %s17
        %s399 = smul.u32 4, %s17
        %s400 = smul.u32 4, %s17
        %s401 = smul.u32 4, %s17
        %p402 = scmp.lt.s32.totalorder %s401, 11
        %s403 = scalar_select %p402, %s401, 11
        %s404 = smul.addr %s403, 4
        %s405 = scalar_lea.vmem %s3, %s404
        %s406 = smul.u32 4, %s17
        %s407 = smul.u32 4, %s17
        %p408 = scmp.lt.s32.totalorder %s407, 11
        %s409 = scalar_select %p408, %s407, 11
        %s410 = smul.addr %s409, 4
        %s411 = scalar_lea.vmem %s4, %s410
        %s412 = smul.u32 4, %s17
        %p413 = scmp.lt.s32.totalorder %s17, 2
        %s414 = scalar_select %p413, %s17, 2
        %s415 = smul.addr %s414, 8
        %s416 = scalar_lea.vmem %s5, %s415
        %v417 = vld [vmem:[%s405] sm:$0xff]
        %v418 = vld [vmem:[%s405 + $0x8] sm:$0xff]
        %vm419 = vcmp.gt.s32.totalorder %v417, 0
        %vm420 = vcmp.gt.s32.totalorder %v418, 0
        %v421 = vsel %vm419, 1, 0
        %v422 = vsel %vm420, 1, 0
        %v423 = vcvt.s32.f32 %v421
        %v424 = vcvt.s32.f32 %v422
        %v425 = vld [vmem:[%s356] sm:$0xff]
        %v426 = vld [vmem:[%s356 + $0x8] sm:$0xff]
        %v427 = vld [vmem:[%s356 + $0x10] sm:$0xff]
        %v428 = vld [vmem:[%s356 + $0x18] sm:$0xff]
        %v433 = vrot.slane %v425, 7
        %v434 = vrot.slane %v433, 2
        %v435 = vrot.slane %v426, 7
        %v436 = vrot.slane %v435, 2
        %v437 = vrot.slane %v427, 7
        %v438 = vrot.slane %v437, 2
        %v439 = vrot.slane %v428, 7
        %v440 = vrot.slane %v439, 2
        %v445 = vmax.f32 %v425, %v434
        %v446 = vmax.f32 %v426, %v436
        %v447 = vmax.f32 %v427, %v438
        %v448 = vmax.f32 %v428, %v440
        %v449 = vsub.f32 %v425, %v434
        %v450 = vsub.f32 %v426, %v436
        %v451 = vsub.f32 %v427, %v438
        %v452 = vsub.f32 %v428, %v440
        %v453 = vand.u32 2147483647, %v449
        %v454 = vand.u32 2147483647, %v450
        %v455 = vand.u32 2147483647, %v451
        %v456 = vand.u32 2147483647, %v452
        %v457 = vsub.f32 0.0, %v453
        %v458 = vsub.f32 0.0, %v454
        %v459 = vsub.f32 0.0, %v455
        %v460 = vsub.f32 0.0, %v456
        %v461 = vmul.f32 %v457, 1.442695
        %v462 = vpow.pop %v461
        %v463 = vmul.f32 %v458, 1.442695
        %v464 = vpow.pop %v463
        %v465 = vmul.f32 %v459, 1.442695
        %v466 = vpow.pop %v465
        %v467 = vmul.f32 %v460, 1.442695
        %v468 = vpow.pop %v467
        %v469 = vadd.f32 %v462, 1.0
        %v470 = vadd.f32 %v464, 1.0
        %v471 = vadd.f32 %v466, 1.0
        %v472 = vadd.f32 %v468, 1.0
        %v473 = vlog2.pop %v469
        %v474 = vmul.f32 %v473, 0.6931472
        %v475 = vlog2.pop %v470
        %v476 = vmul.f32 %v475, 0.6931472
        %v477 = vlog2.pop %v471
        %v478 = vmul.f32 %v477, 0.6931472
        %v479 = vlog2.pop %v472
        %v480 = vmul.f32 %v479, 0.6931472
        %v481 = vadd.f32 %v445, %v474
        %v482 = vadd.f32 %v446, %v476
        %v483 = vadd.f32 %v447, %v478
        %v484 = vadd.f32 %v448, %v480
        %v486 = vunpack.c.l.s4 858984721
        %v487 = vunpack.c.0.s8 %v486
        %v488 = vlaneseq
        %v489 = vshrl.u32 %v488, 7
        %v490 = vsub.s32 %v487, %v489
        %v491 = vrot.slane %v425, %v490
        %v493 = vunpack.c.l.s4 2004309333
        %v494 = vunpack.c.0.s8 %v493
        %v495 = vlaneseq
        %v496 = vshrl.u32 %v495, 7
        %v497 = vsub.s32 %v494, %v496
        %v498 = vrot.slane %v425, %v497
        %v500 = vunpack.c.l.s4 858984721
        %v501 = vunpack.c.0.s8 %v500
        %v502 = vlaneseq
        %v503 = vshrl.u32 %v502, 7
        %v504 = vsub.s32 %v501, %v503
        %v505 = vrot.slane %v426, %v504
        %v507 = vunpack.c.l.s4 2004309333
        %v508 = vunpack.c.0.s8 %v507
        %v509 = vlaneseq
        %v510 = vshrl.u32 %v509, 7
        %v511 = vsub.s32 %v508, %v510
        %v512 = vrot.slane %v426, %v511
        %v514 = vunpack.c.l.s4 858984721
        %v515 = vunpack.c.0.s8 %v514
        %v516 = vlaneseq
        %v517 = vshrl.u32 %v516, 7
        %v518 = vsub.s32 %v515, %v517
        %v519 = vrot.slane %v427, %v518
        %v521 = vunpack.c.l.s4 2004309333
        %v522 = vunpack.c.0.s8 %v521
        %v523 = vlaneseq
        %v524 = vshrl.u32 %v523, 7
        %v525 = vsub.s32 %v522, %v524
        %v526 = vrot.slane %v427, %v525
        %v528 = vunpack.c.l.s4 858984721
        %v529 = vunpack.c.0.s8 %v528
        %v530 = vlaneseq
        %v531 = vshrl.u32 %v530, 7
        %v532 = vsub.s32 %v529, %v531
        %v533 = vrot.slane %v428, %v532
        %v535 = vunpack.c.l.s4 2004309333
        %v536 = vunpack.c.0.s8 %v535
        %v537 = vlaneseq
        %v538 = vshrl.u32 %v537, 7
        %v539 = vsub.s32 %v536, %v538
        %v540 = vrot.slane %v428, %v539
        %vm541 = vcmask 1041409
        %v542 = vsel %vm541, %v505, %v491
        %vm543 = vcmask 1045509
        %v544 = vsel %vm543, %v505, %v542
        %vm545 = vcmask 1042434
        %v546 = vsel %vm545, %v519, %v544
        %vm547 = vcmask 1046534
        %v548 = vsel %vm547, %v519, %v546
        %vm549 = vcmask 1043459
        %v550 = vsel %vm549, %v533, %v548
        %vm551 = vcmask 1047559
        %v552 = vsel %vm551, %v533, %v550
        %v553 = vsel %vm541, %v512, %v498
        %v554 = vsel %vm543, %v512, %v553
        %v555 = vsel %vm545, %v526, %v554
        %v556 = vsel %vm547, %v526, %v555
        %v557 = vsel %vm549, %v540, %v556
        %v558 = vsel %vm551, %v540, %v557
        %v562 = vunpack.c.l.s4 572653568
        %v563 = vunpack.c.0.s8 %v562
        %v564 = vlaneseq
        %v565 = vshrl.u32 %v564, 7
        %v566 = vsub.s32 %v563, %v565
        %v567 = vrot.slane %v425, %v566
        %v569 = vunpack.c.l.s4 1717978180
        %v570 = vunpack.c.0.s8 %v569
        %v571 = vlaneseq
        %v572 = vshrl.u32 %v571, 7
        %v573 = vsub.s32 %v570, %v572
        %v574 = vrot.slane %v425, %v573
        %v576 = vunpack.c.l.s4 572653568
        %v577 = vunpack.c.0.s8 %v576
        %v578 = vlaneseq
        %v579 = vshrl.u32 %v578, 7
        %v580 = vsub.s32 %v577, %v579
        %v581 = vrot.slane %v426, %v580
        %v583 = vunpack.c.l.s4 1717978180
        %v584 = vunpack.c.0.s8 %v583
        %v585 = vlaneseq
        %v586 = vshrl.u32 %v585, 7
        %v587 = vsub.s32 %v584, %v586
        %v588 = vrot.slane %v426, %v587
        %v590 = vunpack.c.l.s4 572653568
        %v591 = vunpack.c.0.s8 %v590
        %v592 = vlaneseq
        %v593 = vshrl.u32 %v592, 7
        %v594 = vsub.s32 %v591, %v593
        %v595 = vrot.slane %v427, %v594
        %v597 = vunpack.c.l.s4 1717978180
        %v598 = vunpack.c.0.s8 %v597
        %v599 = vlaneseq
        %v600 = vshrl.u32 %v599, 7
        %v601 = vsub.s32 %v598, %v600
        %v602 = vrot.slane %v427, %v601
        %v604 = vunpack.c.l.s4 572653568
        %v605 = vunpack.c.0.s8 %v604
        %v606 = vlaneseq
        %v607 = vshrl.u32 %v606, 7
        %v608 = vsub.s32 %v605, %v607
        %v609 = vrot.slane %v428, %v608
        %v611 = vunpack.c.l.s4 1717978180
        %v612 = vunpack.c.0.s8 %v611
        %v613 = vlaneseq
        %v614 = vshrl.u32 %v613, 7
        %v615 = vsub.s32 %v612, %v614
        %v616 = vrot.slane %v428, %v615
        %v617 = vsel %vm541, %v581, %v567
        %v618 = vsel %vm543, %v581, %v617
        %v619 = vsel %vm545, %v595, %v618
        %v620 = vsel %vm547, %v595, %v619
        %v621 = vsel %vm549, %v609, %v620
        %v622 = vsel %vm551, %v609, %v621
        %v623 = vsel %vm541, %v588, %v574
        %v624 = vsel %vm543, %v588, %v623
        %v625 = vsel %vm545, %v602, %v624
        %v626 = vsel %vm547, %v602, %v625
        %v627 = vsel %vm549, %v616, %v626
        %v628 = vsel %vm551, %v616, %v627
        %v631 = vsel %vm419, %v552, %v622
        %v632 = vsel %vm420, %v558, %v628
        %v636 = vunpack.c.l.s4 1983009808
        %v637 = vunpack.c.0.s8 %v636
        %v638 = vlaneseq
        %v639 = vshrl.u32 %v638, 7
        %v640 = vsub.s32 %v637, %v639
        %v641 = vrot.slane %v631, %v640
        %v643 = vunpack.c.l.s4 1983009808
        %v644 = vunpack.c.0.s8 %v643
        %v645 = vlaneseq
        %v646 = vshrl.u32 %v645, 7
        %v647 = vsub.s32 %v644, %v646
        %v648 = vrot.slane %v632, %v647
        %v649 = vcombine.low %v641, %v648
        %v650 = vcombine.high %v641, %v648
        %v651 = vrot.slane %v649, 1
        %v652 = vrot.slane %v650, 1
        %v657 = vsub.f32 %v481, %v649
        %v658 = vsub.f32 %v482, %v651
        %v659 = vsub.f32 %v483, %v650
        %v660 = vsub.f32 %v484, %v652
        %v661 = vlaneseq
        %v662 = vand.u32 %v661, 127
        %v663 = vadd.s32 %v662, 128
        %v664 = vadd.s32 %v662, 256
        %v665 = vadd.s32 %v662, 384
        %s666 = smul.u32 %s17, 512
        %v667 = vstv %s666
        %v668 = vadd.s32 %v662, %v667
        %v669 = vadd.s32 %v663, %v667
        %v670 = vadd.s32 %v664, %v667
        %v671 = vadd.s32 %v665, %v667
        %vm672 = vcmp.lt.s32.totalorder %v668, 1200
        %vm673 = vcmp.lt.s32.totalorder %v669, 1200
        %vm674 = vcmp.lt.s32.totalorder %v670, 1200
        %vm675 = vcmp.lt.s32.totalorder %v671, 1200
        %vm676 = vmxor %vm419, 1
        %vm677 = vmxor %vm420, 1
        %v678 = vsel %vm676, 1, 0
        %v679 = vsel %vm677, 1, 0
        %v680 = vcombine.high %v678, %v678
        %v681 = vcombine.high %v679, %v679
        %vm682 = vcmp.ne.s32.totalorder %v680, 0
        %vm683 = vcmp.ne.s32.totalorder %v681, 0
        %vm684 = vmand %vm672, %vm676
        %vm685 = vmand %vm673, %vm682
        %vm686 = vmand %vm674, %vm677
        %vm687 = vmand %vm675, %vm683
        %v692 = vlaneseq
        %v693 = vshrl.u32 %v692, 7
        %v694 = vsub.s32 0, %v693
        %v695 = vrot.slane %v657, %v694
        %v696 = vlaneseq
        %v697 = vshrl.u32 %v696, 7
        %v698 = vsub.s32 2, %v697
        %v699 = vrot.slane %v657, %v698
        %v700 = vlaneseq
        %v701 = vshrl.u32 %v700, 7
        %v702 = vsub.s32 4, %v701
        %v703 = vrot.slane %v657, %v702
        %v704 = vlaneseq
        %v705 = vshrl.u32 %v704, 7
        %v706 = vsub.s32 6, %v705
        %v707 = vrot.slane %v657, %v706
        %v708 = vlaneseq
        %v709 = vshrl.u32 %v708, 7
        %v710 = vsub.s32 0, %v709
        %v711 = vrot.slane %v658, %v710
        %v712 = vlaneseq
        %v713 = vshrl.u32 %v712, 7
        %v714 = vsub.s32 2, %v713
        %v715 = vrot.slane %v658, %v714
        %v716 = vlaneseq
        %v717 = vshrl.u32 %v716, 7
        %v718 = vsub.s32 4, %v717
        %v719 = vrot.slane %v658, %v718
        %v720 = vlaneseq
        %v721 = vshrl.u32 %v720, 7
        %v722 = vsub.s32 6, %v721
        %v723 = vrot.slane %v658, %v722
        %v724 = vlaneseq
        %v725 = vshrl.u32 %v724, 7
        %v726 = vsub.s32 0, %v725
        %v727 = vrot.slane %v659, %v726
        %v728 = vlaneseq
        %v729 = vshrl.u32 %v728, 7
        %v730 = vsub.s32 2, %v729
        %v731 = vrot.slane %v659, %v730
        %v732 = vlaneseq
        %v733 = vshrl.u32 %v732, 7
        %v734 = vsub.s32 4, %v733
        %v735 = vrot.slane %v659, %v734
        %v736 = vlaneseq
        %v737 = vshrl.u32 %v736, 7
        %v738 = vsub.s32 6, %v737
        %v739 = vrot.slane %v659, %v738
        %v740 = vlaneseq
        %v741 = vshrl.u32 %v740, 7
        %v742 = vsub.s32 0, %v741
        %v743 = vrot.slane %v660, %v742
        %v744 = vlaneseq
        %v745 = vshrl.u32 %v744, 7
        %v746 = vsub.s32 2, %v745
        %v747 = vrot.slane %v660, %v746
        %v748 = vlaneseq
        %v749 = vshrl.u32 %v748, 7
        %v750 = vsub.s32 4, %v749
        %v751 = vrot.slane %v660, %v750
        %v752 = vlaneseq
        %v753 = vshrl.u32 %v752, 7
        %v754 = vsub.s32 6, %v753
        %v755 = vrot.slane %v660, %v754
        %v756 = vsel %vm541, %v711, %v695
        %v757 = vsel %vm545, %v727, %v756
        %v758 = vsel %vm549, %v743, %v757
        %v759 = vsel %vm541, %v715, %v699
        %v760 = vsel %vm545, %v731, %v759
        %v761 = vsel %vm549, %v747, %v760
        %v762 = vsel %vm541, %v719, %v703
        %v763 = vsel %vm545, %v735, %v762
        %v764 = vsel %vm549, %v751, %v763
        %v765 = vsel %vm541, %v723, %v707
        %v766 = vsel %vm545, %v739, %v765
        %v767 = vsel %vm549, %v755, %v766
        %v772 = vsel %vm684, %v758, 0.0
        %v773 = vsel %vm685, %v761, 0.0
        %v774 = vsel %vm686, %v764, 0.0
        %v775 = vsel %vm687, %v767, 0.0
        %v780 = vcombine.low %v772, %v773
        %v781 = vcombine.low %v774, %v775
        %784 = vst [vmem:[%s411] sm:$0xff] %v780
        %785 = vst [vmem:[%s411 + $0x8] sm:$0xff] %v781
        %v786 = vld [vmem:[%s342] sm:$0xff]
        %v787 = vld [vmem:[%s342 + $0x8] sm:$0xff]
        %v788 = vld [vmem:[%s342 + $0x10] sm:$0xff]
        %v789 = vld [vmem:[%s342 + $0x18] sm:$0xff]
        %v790 = vld [vmem:[%s342 + $0x20] sm:$0xff]
        %v791 = vld [vmem:[%s342 + $0x28] sm:$0xff]
        %v792 = vld [vmem:[%s342 + $0x30] sm:$0xff]
        %v793 = vld [vmem:[%s342 + $0x38] sm:$0xff]
        %v794 = vld [vmem:[%s349] sm:$0xff]
        %v795 = vld [vmem:[%s349 + $0x8] sm:$0xff]
        %v796 = vld [vmem:[%s349 + $0x10] sm:$0xff]
        %v797 = vld [vmem:[%s349 + $0x18] sm:$0xff]
        %v798 = vld [vmem:[%s349 + $0x20] sm:$0xff]
        %v799 = vld [vmem:[%s349 + $0x28] sm:$0xff]
        %v800 = vld [vmem:[%s349 + $0x30] sm:$0xff]
        %v801 = vld [vmem:[%s349 + $0x38] sm:$0xff]
        %v802 = vsub.f32 %v786, %v794
        %v803 = vsub.f32 %v787, %v795
        %v804 = vsub.f32 %v788, %v796
        %v805 = vsub.f32 %v789, %v797
        %v806 = vsub.f32 %v790, %v798
        %v807 = vsub.f32 %v791, %v799
        %v808 = vsub.f32 %v792, %v800
        %v809 = vsub.f32 %v793, %v801
        %v810 = vand.u32 2147483647, %v802
        %v811 = vand.u32 2147483647, %v803
        %v812 = vand.u32 2147483647, %v804
        %v813 = vand.u32 2147483647, %v805
        %v814 = vand.u32 2147483647, %v806
        %v815 = vand.u32 2147483647, %v807
        %v816 = vand.u32 2147483647, %v808
        %v817 = vand.u32 2147483647, %v809
        %vm818 = vcmp.lt.f32.partialorder %v810, 1.0
        %vm819 = vcmp.lt.f32.partialorder %v811, 1.0
        %vm820 = vcmp.lt.f32.partialorder %v812, 1.0
        %vm821 = vcmp.lt.f32.partialorder %v813, 1.0
        %vm822 = vcmp.lt.f32.partialorder %v814, 1.0
        %vm823 = vcmp.lt.f32.partialorder %v815, 1.0
        %vm824 = vcmp.lt.f32.partialorder %v816, 1.0
        %vm825 = vcmp.lt.f32.partialorder %v817, 1.0
        %v826 = vmul.f32 %v802, 0.5
        %v827 = vmul.f32 %v803, 0.5
        %v828 = vmul.f32 %v804, 0.5
        %v829 = vmul.f32 %v805, 0.5
        %v830 = vmul.f32 %v806, 0.5
        %v831 = vmul.f32 %v807, 0.5
        %v832 = vmul.f32 %v808, 0.5
        %v833 = vmul.f32 %v809, 0.5
        %v834 = vmul.f32 %v826, %v802
        %v835 = vmul.f32 %v827, %v803
        %v836 = vmul.f32 %v828, %v804
        %v837 = vmul.f32 %v829, %v805
        %v838 = vmul.f32 %v830, %v806
        %v839 = vmul.f32 %v831, %v807
        %v840 = vmul.f32 %v832, %v808
        %v841 = vmul.f32 %v833, %v809
        %v842 = vsub.f32 %v810, 0.5
        %v843 = vsub.f32 %v811, 0.5
        %v844 = vsub.f32 %v812, 0.5
        %v845 = vsub.f32 %v813, 0.5
        %v846 = vsub.f32 %v814, 0.5
        %v847 = vsub.f32 %v815, 0.5
        %v848 = vsub.f32 %v816, 0.5
        %v849 = vsub.f32 %v817, 0.5
        %v850 = vsel %vm818, %v834, %v842
        %v851 = vsel %vm819, %v835, %v843
        %v852 = vsel %vm820, %v836, %v844
        %v853 = vsel %vm821, %v837, %v845
        %v854 = vsel %vm822, %v838, %v846
        %v855 = vsel %vm823, %v839, %v847
        %v856 = vsel %vm824, %v840, %v848
        %v857 = vsel %vm825, %v841, %v849
        %v866 = vcombine.high %v850, %v850
        %v867 = vcombine.high %v851, %v851
        %v868 = vcombine.high %v852, %v852
        %v869 = vcombine.high %v853, %v853
        %v870 = vcombine.high %v854, %v854
        %v871 = vcombine.high %v855, %v855
        %v872 = vcombine.high %v856, %v856
        %v873 = vcombine.high %v857, %v857
        %vm882 = vcmask 1043456
        %v883 = vsel %vm882, %v850, 0.0
        %v884 = vrot.slane %v883, 4
        %v885 = vadd.f32 %v883, %v884
        %v886 = vrot.slane %v885, 2
        %v887 = vadd.f32 %v885, %v886
        %v888 = vrot.slane %v887, 1
        %v889 = vadd.f32 %v887, %v888
        %v890 = vsel %vm882, %v866, 0.0
        %v891 = vrot.slane %v890, 4
        %v892 = vadd.f32 %v890, %v891
        %v893 = vrot.slane %v892, 2
        %v894 = vadd.f32 %v892, %v893
        %v895 = vrot.slane %v894, 1
        %v896 = vadd.f32 %v894, %v895
        %v897 = vsel %vm882, %v851, 0.0
        %v898 = vrot.slane %v897, 4
        %v899 = vadd.f32 %v897, %v898
        %v900 = vrot.slane %v899, 2
        %v901 = vadd.f32 %v899, %v900
        %v902 = vrot.slane %v901, 1
        %v903 = vadd.f32 %v901, %v902
        %v904 = vsel %vm882, %v867, 0.0
        %v905 = vrot.slane %v904, 4
        %v906 = vadd.f32 %v904, %v905
        %v907 = vrot.slane %v906, 2
        %v908 = vadd.f32 %v906, %v907
        %v909 = vrot.slane %v908, 1
        %v910 = vadd.f32 %v908, %v909
        %v911 = vsel %vm882, %v852, 0.0
        %v912 = vrot.slane %v911, 4
        %v913 = vadd.f32 %v911, %v912
        %v914 = vrot.slane %v913, 2
        %v915 = vadd.f32 %v913, %v914
        %v916 = vrot.slane %v915, 1
        %v917 = vadd.f32 %v915, %v916
        %v918 = vsel %vm882, %v868, 0.0
        %v919 = vrot.slane %v918, 4
        %v920 = vadd.f32 %v918, %v919
        %v921 = vrot.slane %v920, 2
        %v922 = vadd.f32 %v920, %v921
        %v923 = vrot.slane %v922, 1
        %v924 = vadd.f32 %v922, %v923
        %v925 = vsel %vm882, %v853, 0.0
        %v926 = vrot.slane %v925, 4
        %v927 = vadd.f32 %v925, %v926
        %v928 = vrot.slane %v927, 2
        %v929 = vadd.f32 %v927, %v928
        %v930 = vrot.slane %v929, 1
        %v931 = vadd.f32 %v929, %v930
        %v932 = vsel %vm882, %v869, 0.0
        %v933 = vrot.slane %v932, 4
        %v934 = vadd.f32 %v932, %v933
        %v935 = vrot.slane %v934, 2
        %v936 = vadd.f32 %v934, %v935
        %v937 = vrot.slane %v936, 1
        %v938 = vadd.f32 %v936, %v937
        %v939 = vsel %vm882, %v854, 0.0
        %v940 = vrot.slane %v939, 4
        %v941 = vadd.f32 %v939, %v940
        %v942 = vrot.slane %v941, 2
        %v943 = vadd.f32 %v941, %v942
        %v944 = vrot.slane %v943, 1
        %v945 = vadd.f32 %v943, %v944
        %v946 = vsel %vm882, %v870, 0.0
        %v947 = vrot.slane %v946, 4
        %v948 = vadd.f32 %v946, %v947
        %v949 = vrot.slane %v948, 2
        %v950 = vadd.f32 %v948, %v949
        %v951 = vrot.slane %v950, 1
        %v952 = vadd.f32 %v950, %v951
        %v953 = vsel %vm882, %v855, 0.0
        %v954 = vrot.slane %v953, 4
        %v955 = vadd.f32 %v953, %v954
        %v956 = vrot.slane %v955, 2
        %v957 = vadd.f32 %v955, %v956
        %v958 = vrot.slane %v957, 1
        %v959 = vadd.f32 %v957, %v958
        %v960 = vsel %vm882, %v871, 0.0
        %v961 = vrot.slane %v960, 4
        %v962 = vadd.f32 %v960, %v961
        %v963 = vrot.slane %v962, 2
        %v964 = vadd.f32 %v962, %v963
        %v965 = vrot.slane %v964, 1
        %v966 = vadd.f32 %v964, %v965
        %v967 = vsel %vm882, %v856, 0.0
        %v968 = vrot.slane %v967, 4
        %v969 = vadd.f32 %v967, %v968
        %v970 = vrot.slane %v969, 2
        %v971 = vadd.f32 %v969, %v970
        %v972 = vrot.slane %v971, 1
        %v973 = vadd.f32 %v971, %v972
        %v974 = vsel %vm882, %v872, 0.0
        %v975 = vrot.slane %v974, 4
        %v976 = vadd.f32 %v974, %v975
        %v977 = vrot.slane %v976, 2
        %v978 = vadd.f32 %v976, %v977
        %v979 = vrot.slane %v978, 1
        %v980 = vadd.f32 %v978, %v979
        %v981 = vsel %vm882, %v857, 0.0
        %v982 = vrot.slane %v981, 4
        %v983 = vadd.f32 %v981, %v982
        %v984 = vrot.slane %v983, 2
        %v985 = vadd.f32 %v983, %v984
        %v986 = vrot.slane %v985, 1
        %v987 = vadd.f32 %v985, %v986
        %v988 = vsel %vm882, %v873, 0.0
        %v989 = vrot.slane %v988, 4
        %v990 = vadd.f32 %v988, %v989
        %v991 = vrot.slane %v990, 2
        %v992 = vadd.f32 %v990, %v991
        %v993 = vrot.slane %v992, 1
        %v994 = vadd.f32 %v992, %v993
        %v1011 = vadd.f32 %v889, %v695
        %v1012 = vadd.f32 %v896, %v699
        %v1013 = vadd.f32 %v903, %v703
        %v1014 = vadd.f32 %v910, %v707
        %v1015 = vadd.f32 %v917, %v711
        %v1016 = vadd.f32 %v924, %v715
        %v1017 = vadd.f32 %v931, %v719
        %v1018 = vadd.f32 %v938, %v723
        %v1019 = vadd.f32 %v945, %v727
        %v1020 = vadd.f32 %v952, %v731
        %v1021 = vadd.f32 %v959, %v735
        %v1022 = vadd.f32 %v966, %v739
        %v1023 = vadd.f32 %v973, %v743
        %v1024 = vadd.f32 %v980, %v747
        %v1025 = vadd.f32 %v987, %v751
        %v1026 = vadd.f32 %v994, %v755
        %v1029 = vcombine.high %v423, %v423
        %v1030 = vcombine.high %v424, %v424
        %v1031 = vrot.slane %v423, 1
        %v1032 = vrot.slane %v1029, 1
        %v1033 = vrot.slane %v424, 1
        %v1034 = vrot.slane %v1030, 1
        %v1035 = vrot.slane %v423, 2
        %v1036 = vrot.slane %v1029, 2
        %v1037 = vrot.slane %v424, 2
        %v1038 = vrot.slane %v1030, 2
        %v1039 = vrot.slane %v423, 3
        %v1040 = vrot.slane %v1029, 3
        %v1041 = vrot.slane %v424, 3
        %v1042 = vrot.slane %v1030, 3
        %v1059 = vmul.f32 %v1011, %v423
        %v1060 = vmul.f32 %v1012, %v1029
        %v1061 = vmul.f32 %v1013, %v424
        %v1062 = vmul.f32 %v1014, %v1030
        %v1063 = vmul.f32 %v1015, %v1031
        %v1064 = vmul.f32 %v1016, %v1032
        %v1065 = vmul.f32 %v1017, %v1033
        %v1066 = vmul.f32 %v1018, %v1034
        %v1067 = vmul.f32 %v1019, %v1035
        %v1068 = vmul.f32 %v1020, %v1036
        %v1069 = vmul.f32 %v1021, %v1037
        %v1070 = vmul.f32 %v1022, %v1038
        %v1071 = vmul.f32 %v1023, %v1039
        %v1072 = vmul.f32 %v1024, %v1040
        %v1073 = vmul.f32 %v1025, %v1041
        %v1074 = vmul.f32 %v1026, %v1042
        %v1091 = vrot.slane %v1063, 7
        %v1092 = vsel %vm541, %v1091, %v1059
        %v1093 = vrot.slane %v1067, 6
        %v1094 = vsel %vm545, %v1093, %v1092
        %v1095 = vrot.slane %v1071, 5
        %v1096 = vsel %vm549, %v1095, %v1094
        %v1097 = vrot.slane %v1064, 7
        %v1098 = vsel %vm541, %v1097, %v1060
        %v1099 = vrot.slane %v1068, 6
        %v1100 = vsel %vm545, %v1099, %v1098
        %v1101 = vrot.slane %v1072, 5
        %v1102 = vsel %vm549, %v1101, %v1100
        %v1103 = vrot.slane %v1065, 7
        %v1104 = vsel %vm541, %v1103, %v1061
        %v1105 = vrot.slane %v1069, 6
        %v1106 = vsel %vm545, %v1105, %v1104
        %v1107 = vrot.slane %v1073, 5
        %v1108 = vsel %vm549, %v1107, %v1106
        %v1109 = vrot.slane %v1066, 7
        %v1110 = vsel %vm541, %v1109, %v1062
        %v1111 = vrot.slane %v1070, 6
        %v1112 = vsel %vm545, %v1111, %v1110
        %v1113 = vrot.slane %v1074, 5
        %v1114 = vsel %vm549, %v1113, %v1112
        %v1119 = vsel %vm882, %v1096, 0.0
        %v1120 = vsel %vm882, %v1102, 0.0
        %v1121 = vadd.f32 %v1119, %v1120
        %v1122 = vsel %vm882, %v1108, 0.0
        %v1123 = vadd.f32 %v1121, %v1122
        %v1124 = vsel %vm882, %v1114, 0.0
        %v1125 = vadd.f32 %v1123, %v1124
        %1126 = vadd.xlane.f32.xlu0 %v1125
        %v1127 = vpop.xlane.xlu0 %1126
        %v1128 = vrot.slane %v1127, 4
        %v1129 = vadd.f32 %v1127, %v1128
        %v1130 = vrot.slane %v1129, 2
        %v1131 = vadd.f32 %v1129, %v1130
        %v1132 = vrot.slane %v1131, 1
        %v1133 = vadd.f32 %v1131, %v1132
        %s1134 = vtos %v1133
        %v1135 = vstv %s1134
        %1136 = vst [vmem:[%s416] sm:$0xff] %v1135
        %s1137 = smul.u32 4, %s17
        %p1138 = scmp.lt.s32.totalorder %s1137, 11
        %s1139 = scalar_select %p1138, %s1137, 11
        %s1140 = smul.addr %s1139, 4
        %s1141 = scalar_lea.vmem %s4, %s1140
        %p1142 = scmp.lt.s32.totalorder %s17, 2
        %s1143 = scalar_select %p1142, %s17, 2
        %s1144 = smul.addr %s1143, 8
        %s1145 = scalar_lea.vmem %s5, %s1144
        // Predicated region
        $region121: #{faceboxloss_forward.1} parent=107 // pred_check
          %p1146 = pneg %p139
        $region122: #{faceboxloss_forward.1} parent=107 // pred_check_branch
          %1148 = sbr.rel (%p1146) target = $region124
        $region123: #{faceboxloss_forward.1} parent=107 // pred_region
          %s1149 = smul.u32 4, %s17
        $region124: #{faceboxloss_forward.1} parent=107 // pred_fallthru
          _
        // Predicated region
        $region125: #{faceboxloss_forward.1} parent=107 // pred_check
          %p1150 = pneg %p165
        $region126: #{faceboxloss_forward.1} parent=107 // pred_check_branch
          %1152 = sbr.rel (%p1150) target = $region128
        $region127: #{faceboxloss_forward.1} parent=107 // pred_region
          _
        $region128: #{faceboxloss_forward.1} parent=107 // pred_fallthru
          _
      $region108: #{faceboxloss_forward.1} parent=5 // pred_fallthru
        _
      %p1153 = scmp.le.s32.totalorder 2, %s12
      // Predicated region
      $region129: #{faceboxloss_forward.1} parent=5 // pred_check
        %p1154 = pneg %p1153
      $region130: #{faceboxloss_forward.1} parent=5 // pred_check_branch
        %1156 = sbr.rel (%p1154) target = $region132
      $region131: #{faceboxloss_forward.1} parent=5 // pred_region
        %s1157 = ssub.s32 %s12, 2
        // Predicated region
        $region133: #{faceboxloss_forward.1} parent=131 // pred_check
          %p1158 = pneg %p145
        $region134: #{faceboxloss_forward.1} parent=131 // pred_check_branch
          %1160 = sbr.rel (%p1158) target = $region136
        $region135: #{faceboxloss_forward.1} parent=131 // pred_region
          %s1161 = smul.u32 4, %s18
          %p1162 = scmp.lt.s32.totalorder %s1161, 11
          %s1163 = scalar_select %p1162, %s1161, 11
          %s1164 = smul.addr %s1163, 4
          %s1165 = scalar_lea.vmem %s4, %s1164
        $region136: #{faceboxloss_forward.1} parent=131 // pred_fallthru
          _
        // Predicated region
        $region137: #{faceboxloss_forward.1} parent=131 // pred_check
          %p1166 = pneg %p171
        $region138: #{faceboxloss_forward.1} parent=131 // pred_check_branch
          %1168 = sbr.rel (%p1166) target = $region140
        $region139: #{faceboxloss_forward.1} parent=131 // pred_region
          %p1169 = scmp.lt.s32.totalorder %s18, 2
          %s1170 = scalar_select %p1169, %s18, 2
          %s1171 = smul.addr %s1170, 8
          %s1172 = scalar_lea.vmem %s5, %s1171
        $region140: #{faceboxloss_forward.1} parent=131 // pred_fallthru
          _
      $region132: #{faceboxloss_forward.1} parent=5 // pred_fallthru
        _
    $region6: #{faceboxloss_forward.1} parent=1 // loop_footer
      %s16 = sadd.s32 1, %s12
    $region7: #{faceboxloss_forward.1} parent=1 // loop_footer_branch
      %11 = sbr.rel target = $region3
    $region8: #{faceboxloss_forward.1} parent=1 // loop_exit
      _

</llo_original>
